<compile_context>
chip_gen: v6e
topology: v6e:2x2x1
jax: 0.10.0
libtpu: 0.0.40
codegen_flags: <defaults>
</compile_context>

<pallas_src>
import jax
import jax.numpy as jnp
from jax.experimental import pallas as pl
from jax.experimental.pallas import tpu as pltpu


def _round_up(n, m):
    return ((n + m - 1) // m) * m


# ---------------------------------------------------------------------------
# Kernel
# ---------------------------------------------------------------------------
def vae_kernel(x_ref, eps_ref,
               w1_ref, b1_ref,
               w23_ref, b23_ref,
               w4_ref, b4_ref,
               w5_ref, b5_ref,
               xr_ref, mulv_ref):
    """Whole VAE forward on one (tile_b, *) batch tile.

    Weights may be f32 or bf16; activations are cast to the weight dtype for
    the MXU and everything accumulates / post-processes in f32. The mu and
    log_var heads are fused: w23 = [w2 | w3] with shape (h_dim, 2*zp).
    """
    x = x_ref[...]                        # (tb, count_size) f32
    eps = eps_ref[...]                    # (tb, zp)         f32 (zero-padded)
    zp = eps.shape[1]

    def dense(a, w_ref, b_ref):
        return jnp.dot(a.astype(w_ref.dtype), w_ref[...],
                       preferred_element_type=jnp.float32) + b_ref[...]

    # ---- encode ----
    h = jnp.maximum(dense(x, w1_ref, b1_ref), 0.0)            # relu
    mulv = dense(h, w23_ref, b23_ref)                         # (tb, 2*zp)
    mu = mulv[:, :zp]                                         # lane-tile slice
    log_var = mulv[:, zp:]

    # ---- reparameterize ----  (padded lanes: mu=0, log_var=0, eps=0 -> z=0)
    z = mu + eps * jnp.exp(log_var * 0.5)

    # ---- decode ----
    h2 = jnp.maximum(dense(z, w4_ref, b4_ref), 0.0)           # relu
    xr_ref[...] = jax.nn.sigmoid(dense(h2, w5_ref, b5_ref))

    mulv_ref[...] = mulv                                      # [mu | log_var]


# ---------------------------------------------------------------------------
# One-time parameter preparation (hoisted out of the per-call wrapper)
# ---------------------------------------------------------------------------
def prepare_params(params, *, matmul_dtype=jnp.bfloat16):
    """Pad z-dim to a 128-lane multiple, fuse the mu/log_var heads and cast
    the MXU operands once. Returns (prepared_params, meta)."""
    count_size, h_dim = params["w1"].shape
    z_dim = params["w2"].shape[1]
    zp = _round_up(z_dim, 128)
    f32 = jnp.float32

    w23 = jnp.zeros((h_dim, 2 * zp), f32)
    w23 = w23.at[:, :z_dim].set(params["w2"]).at[:, zp:zp + z_dim].set(params["w3"])
    b23 = jnp.zeros((1, 2 * zp), f32)
    b23 = b23.at[:, :z_dim].set(params["b2"]).at[:, zp:zp + z_dim].set(params["b3"])
    w4 = jnp.zeros((zp, h_dim), f32).at[:z_dim, :].set(params["w4"])

    prep = {
        "w1": params["w1"].astype(matmul_dtype), "b1": params["b1"],
        "w23": w23.astype(matmul_dtype),         "b23": b23,
        "w4": w4.astype(matmul_dtype),           "b4": params["b4"],
        "w5": params["w5"].astype(matmul_dtype), "b5": params["b5"],
    }
    meta = {"count_size": count_size, "h_dim": h_dim, "z_dim": z_dim, "zp": zp}
    return prep, meta


# ---------------------------------------------------------------------------
# Batch tiling policy
# ---------------------------------------------------------------------------
def _pick_tile_b(B):
    """>= 2 grid steps once B >= 16 (v7x megacore sharding); >= 4 steps with
    tile_b >= 128 for large batches (DMA/compute pipelining)."""
    if B < 16:
        return max(B, 1)                           # too small to split (sublane=8)
    if B < 512:
        return _round_up(pl.cdiv(B, 2), 8)         # 2 steps
    if B <= 2048:
        return _round_up(pl.cdiv(B, 4), 8)         # 4 steps, tile_b >= 128
    return 256                                     # many steps, full MXU M


# ---------------------------------------------------------------------------
# Forward wrapper
# ---------------------------------------------------------------------------
def vae_forward(x, eps, prep, meta, *, tile_b=None):
    """x: (B, count_size) f32; eps: (B, z_dim) f32 (randn_like noise).
    Returns (x_reconst, mu, log_var)."""
    B, count_size = x.shape
    z_dim, zp = meta["z_dim"], meta["zp"]
    assert count_size == meta["count_size"]
    assert eps.shape == (B, z_dim)

    if tile_b is None:
        tile_b = _pick_tile_b(B)

    # Pad the batch to a tile multiple (never fall back to a 1-step grid).
    Bp = _round_up(B, tile_b)
    assert tile_b == Bp or tile_b % 8 == 0

    eps_p = jnp.zeros((Bp, zp), jnp.float32).at[:B, :z_dim].set(eps)
    x_p = x if Bp == B else jnp.zeros((Bp, count_size), x.dtype).at[:B].set(x)

    grid = (Bp // tile_b,)

    def batch_spec(feat):
        return pl.BlockSpec((tile_b, feat), lambda i: (i, 0))

    def resident(arr):
        # Constant-index (grid-resident) operand: single-buffered so only one
        # VMEM copy of each weight/bias is allocated.
        return pl.BlockSpec(arr.shape, lambda i: (0, 0),
                            pipeline_mode=pl.Buffered(1))

    in_specs = [
        batch_spec(count_size),               # x
        batch_spec(zp),                       # eps (padded, lane-dense)
        resident(prep["w1"]), resident(prep["b1"]),
        resident(prep["w23"]), resident(prep["b23"]),
        resident(prep["w4"]), resident(prep["b4"]),
        resident(prep["w5"]), resident(prep["b5"]),
    ]
    out_specs = [
        batch_spec(count_size),               # x_reconst
        batch_spec(2 * zp),                   # [mu | log_var] fused, lane-dense
    ]
    out_shape = [
        jax.ShapeDtypeStruct((Bp, count_size), jnp.float32),
        jax.ShapeDtypeStruct((Bp, 2 * zp), jnp.float32),
    ]

    fn = pl.pallas_call(
        vae_kernel,
        grid_spec=pl.GridSpec(grid=grid, in_specs=in_specs, out_specs=out_specs),
        out_shape=out_shape,
        compiler_params=pltpu.CompilerParams(
            dimension_semantics=("parallel",),
            vmem_limit_bytes=48 * 1024 * 1024,
        ),
    )
    xr, mulv = fn(x_p, eps_p,
                  prep["w1"], prep["b1"], prep["w23"], prep["b23"],
                  prep["w4"], prep["b4"], prep["w5"], prep["b5"])

    # Un-pad batch and z dimension outside the kernel (cheap slices).
    return xr[:B], mulv[:B, :z_dim], mulv[:B, zp:zp + z_dim]


# ---------------------------------------------------------------------------
# Reference + synthetic init
# ---------------------------------------------------------------------------
def init_params(key, count_size, h_dim, z_dim):
    """Deterministic synthetic parameter init (Linear-style uniform)."""
    dims = [
        ("w1", "b1", count_size, h_dim),
        ("w2", "b2", h_dim, z_dim),
        ("w3", "b3", h_dim, z_dim),
        ("w4", "b4", z_dim, h_dim),
        ("w5", "b5", h_dim, count_size),
    ]
    params = {}
    for wname, bname, fan_in, fan_out in dims:
        key, kw, kb = jax.random.split(key, 3)
        bound = 1.0 / jnp.sqrt(jnp.float32(fan_in))
        params[wname] = jax.random.uniform(
            kw, (fan_in, fan_out), jnp.float32, -bound, bound)
        params[bname] = jax.random.uniform(
            kb, (1, fan_out), jnp.float32, -bound, bound)
    return params


def vae_forward_ref(x, eps, params):
    """Pure-JAX reference (mirrors PyTorch semantics)."""
    h = jax.nn.relu(x @ params["w1"] + params["b1"])
    mu = h @ params["w2"] + params["b2"]
    log_var = h @ params["w3"] + params["b3"]
    std = jnp.exp(log_var / 2.0)
    z = mu + eps * std
    h2 = jax.nn.relu(z @ params["w4"] + params["b4"])
    x_reconst = jax.nn.sigmoid(h2 @ params["w5"] + params["b5"])
    return x_reconst, mu, log_var


if __name__ == "__main__":
    # Small shapes consistent with the module (count_size, h_dim, z_dim).
    B, COUNT_SIZE, H_DIM, Z_DIM = 16, 256, 128, 32

    key = jax.random.PRNGKey(0)
    kx, keps, kp = jax.random.split(key, 3)

    x = jax.random.uniform(kx, (B, COUNT_SIZE), jnp.float32)   # count-like inputs
    eps = jax.random.normal(keps, (B, Z_DIM), jnp.float32)     # randn_like noise
    params = init_params(kp, COUNT_SIZE, H_DIM, Z_DIM)

    xr_r, mu_r, lv_r = vae_forward_ref(x, eps, params)

    # f32 MXU path (exact match to the reference).
    prep32, meta32 = prepare_params(params, matmul_dtype=jnp.float32)
    xr, mu, log_var = vae_forward(x, eps, prep32, meta32)
    jax.block_until_ready((xr, mu, log_var))
    assert xr.shape == (B, COUNT_SIZE) and mu.shape == (B, Z_DIM)
    assert jnp.allclose(xr, xr_r, atol=1e-5, rtol=1e-5)
    assert jnp.allclose(mu, mu_r, atol=1e-5, rtol=1e-5)
    assert jnp.allclose(log_var, lv_r, atol=1e-5, rtol=1e-5)

    # Default fast path: bf16 MXU operands (native on v5e/v6e/v7x), f32
    # accumulation / pointwise math -> only operand-rounding error.
    prep_bf, meta_bf = prepare_params(params)
    xr_bf, mu_bf, lv_bf = vae_forward(x, eps, prep_bf, meta_bf)
    jax.block_until_ready((xr_bf, mu_bf, lv_bf))
    assert jnp.allclose(xr_bf, xr_r, atol=1e-1, rtol=1e-1)
    assert jnp.allclose(mu_bf, mu_r, atol=1e-1, rtol=1e-1)
    assert jnp.allclose(lv_bf, lv_r, atol=1e-1, rtol=1e-1)

    print("KERNEL_OK")
</pallas_src>

<mosaic_0001>
module attributes {stable_mosaic.version = 11 : i64} {
  func.func @vae_kernel(%arg0: i32, %arg1: memref<8x256xf32, #tpu.memory_space<vmem>>, %arg2: memref<8x128xf32, #tpu.memory_space<vmem>>, %arg3: memref<256x128xf32, #tpu.memory_space<vmem>>, %arg4: memref<1x128xf32, #tpu.memory_space<vmem>>, %arg5: memref<128x256xf32, #tpu.memory_space<vmem>>, %arg6: memref<1x256xf32, #tpu.memory_space<vmem>>, %arg7: memref<128x128xf32, #tpu.memory_space<vmem>>, %arg8: memref<1x128xf32, #tpu.memory_space<vmem>>, %arg9: memref<128x256xf32, #tpu.memory_space<vmem>>, %arg10: memref<1x256xf32, #tpu.memory_space<vmem>>, %arg11: memref<8x256xf32, #tpu.memory_space<vmem>>, %arg12: memref<8x256xf32, #tpu.memory_space<vmem>>) attributes {dimension_semantics = [#tpu.dimension_semantics<parallel>], iteration_bounds = array<i64: 2>, scalar_prefetch = 0 : i64, scratch_operands = 0 : i64, tpu.core_type = #tpu.core_type<tc>, window_params = [{transform_indices = @transform_0, window_bounds = array<i64: 8, 256>}, {transform_indices = @transform_1, window_bounds = array<i64: 8, 128>}, {pipeline_mode = #tpu.pipeline_mode<synchronous>, transform_indices = @transform_2, window_bounds = array<i64: 256, 128>}, {pipeline_mode = #tpu.pipeline_mode<synchronous>, transform_indices = @transform_3, window_bounds = array<i64: 1, 128>}, {pipeline_mode = #tpu.pipeline_mode<synchronous>, transform_indices = @transform_4, window_bounds = array<i64: 128, 256>}, {pipeline_mode = #tpu.pipeline_mode<synchronous>, transform_indices = @transform_5, window_bounds = array<i64: 1, 256>}, {pipeline_mode = #tpu.pipeline_mode<synchronous>, transform_indices = @transform_6, window_bounds = array<i64: 128, 128>}, {pipeline_mode = #tpu.pipeline_mode<synchronous>, transform_indices = @transform_7, window_bounds = array<i64: 1, 128>}, {pipeline_mode = #tpu.pipeline_mode<synchronous>, transform_indices = @transform_8, window_bounds = array<i64: 128, 256>}, {pipeline_mode = #tpu.pipeline_mode<synchronous>, transform_indices = @transform_9, window_bounds = array<i64: 1, 256>}, {transform_indices = @transform_10, window_bounds = array<i64: 8, 256>}, {transform_indices = @transform_11, window_bounds = array<i64: 8, 256>}]} {
    %c0 = arith.constant 0 : index
    %c0_0 = arith.constant 0 : index
    %0 = vector.load %arg1[%c0, %c0_0] : memref<8x256xf32, #tpu.memory_space<vmem>>, vector<8x256xf32>
    %c0_1 = arith.constant 0 : index
    %c0_2 = arith.constant 0 : index
    %1 = vector.load %arg2[%c0_1, %c0_2] : memref<8x128xf32, #tpu.memory_space<vmem>>, vector<8x128xf32>
    %c0_3 = arith.constant 0 : index
    %c0_4 = arith.constant 0 : index
    %2 = vector.load %arg3[%c0_3, %c0_4] : memref<256x128xf32, #tpu.memory_space<vmem>>, vector<256x128xf32>
    %cst = arith.constant dense<0.000000e+00> : vector<8x128xf32>
    %3 = tpu.matmul %0, %2, %cst {dimension_numbers = #tpu.dot_dimension_numbers<[1], [0], [0], [1], [0, 0, 1, 1], [], []>} : vector<8x256xf32>, vector<256x128xf32>, vector<8x128xf32> -> vector<8x128xf32>
    %c0_5 = arith.constant 0 : index
    %c0_6 = arith.constant 0 : index
    %4 = vector.load %arg4[%c0_5, %c0_6] : memref<1x128xf32, #tpu.memory_space<vmem>>, vector<1x128xf32>
    %5 = vector.broadcast %4 : vector<1x128xf32> to vector<8x128xf32>
    %6 = arith.addf %3, %5 : vector<8x128xf32>
    %cst_7 = arith.constant 0.000000e+00 : f32
    %7 = vector.broadcast %cst_7 : f32 to vector<8x128xf32>
    %8 = arith.maximumf %6, %7 : vector<8x128xf32>
    %c0_8 = arith.constant 0 : index
    %c0_9 = arith.constant 0 : index
    %9 = vector.load %arg5[%c0_8, %c0_9] : memref<128x256xf32, #tpu.memory_space<vmem>>, vector<128x256xf32>
    %cst_10 = arith.constant dense<0.000000e+00> : vector<8x256xf32>
    %10 = tpu.matmul %8, %9, %cst_10 {dimension_numbers = #tpu.dot_dimension_numbers<[1], [0], [0], [1], [0, 0, 1, 1], [], []>} : vector<8x128xf32>, vector<128x256xf32>, vector<8x256xf32> -> vector<8x256xf32>
    %c0_11 = arith.constant 0 : index
    %c0_12 = arith.constant 0 : index
    %11 = vector.load %arg6[%c0_11, %c0_12] : memref<1x256xf32, #tpu.memory_space<vmem>>, vector<1x256xf32>
    %12 = vector.broadcast %11 : vector<1x256xf32> to vector<8x256xf32>
    %13 = arith.addf %10, %12 : vector<8x256xf32>
    %14 = vector.extract_strided_slice %13 {offsets = [0, 0], sizes = [8, 128], strides = [1, 1]} : vector<8x256xf32> to vector<8x128xf32>
    %15 = vector.extract_strided_slice %13 {offsets = [0, 128], sizes = [8, 128], strides = [1, 1]} : vector<8x256xf32> to vector<8x128xf32>
    %cst_13 = arith.constant 5.000000e-01 : f32
    %16 = vector.broadcast %cst_13 : f32 to vector<8x128xf32>
    %17 = arith.mulf %15, %16 : vector<8x128xf32>
    %18 = math.exp %17 : vector<8x128xf32>
    %19 = arith.mulf %1, %18 : vector<8x128xf32>
    %20 = arith.addf %14, %19 : vector<8x128xf32>
    %c0_14 = arith.constant 0 : index
    %c0_15 = arith.constant 0 : index
    %21 = vector.load %arg7[%c0_14, %c0_15] : memref<128x128xf32, #tpu.memory_space<vmem>>, vector<128x128xf32>
    %cst_16 = arith.constant dense<0.000000e+00> : vector<8x128xf32>
    %22 = tpu.matmul %20, %21, %cst_16 {dimension_numbers = #tpu.dot_dimension_numbers<[1], [0], [0], [1], [0, 0, 1, 1], [], []>} : vector<8x128xf32>, vector<128x128xf32>, vector<8x128xf32> -> vector<8x128xf32>
    %c0_17 = arith.constant 0 : index
    %c0_18 = arith.constant 0 : index
    %23 = vector.load %arg8[%c0_17, %c0_18] : memref<1x128xf32, #tpu.memory_space<vmem>>, vector<1x128xf32>
    %24 = vector.broadcast %23 : vector<1x128xf32> to vector<8x128xf32>
    %25 = arith.addf %22, %24 : vector<8x128xf32>
    %cst_19 = arith.constant 0.000000e+00 : f32
    %26 = vector.broadcast %cst_19 : f32 to vector<8x128xf32>
    %27 = arith.maximumf %25, %26 : vector<8x128xf32>
    %c0_20 = arith.constant 0 : index
    %c0_21 = arith.constant 0 : index
    %28 = vector.load %arg9[%c0_20, %c0_21] : memref<128x256xf32, #tpu.memory_space<vmem>>, vector<128x256xf32>
    %cst_22 = arith.constant dense<0.000000e+00> : vector<8x256xf32>
    %29 = tpu.matmul %27, %28, %cst_22 {dimension_numbers = #tpu.dot_dimension_numbers<[1], [0], [0], [1], [0, 0, 1, 1], [], []>} : vector<8x128xf32>, vector<128x256xf32>, vector<8x256xf32> -> vector<8x256xf32>
    %c0_23 = arith.constant 0 : index
    %c0_24 = arith.constant 0 : index
    %30 = vector.load %arg10[%c0_23, %c0_24] : memref<1x256xf32, #tpu.memory_space<vmem>>, vector<1x256xf32>
    %31 = vector.broadcast %30 : vector<1x256xf32> to vector<8x256xf32>
    %32 = arith.addf %29, %31 : vector<8x256xf32>
    %33 = arith.negf %32 : vector<8x256xf32>
    %34 = math.exp %33 : vector<8x256xf32>
    %cst_25 = arith.constant 1.000000e+00 : f32
    %35 = vector.broadcast %cst_25 : f32 to vector<8x256xf32>
    %36 = arith.addf %35, %34 : vector<8x256xf32>
    %37 = arith.divf %35, %36 : vector<8x256xf32>
    %c0_26 = arith.constant 0 : index
    %c0_27 = arith.constant 0 : index
    %38 = vector.load %arg11[%c0_26, %c0_27] : memref<8x256xf32, #tpu.memory_space<vmem>>, vector<8x256xf32>
    tpu.vector_store %arg11[%c0_26, %c0_27], %37 {strides = array<i32>} : memref<8x256xf32, #tpu.memory_space<vmem>>, vector<8x256xf32>,
    %c0_28 = arith.constant 0 : index
    %c0_29 = arith.constant 0 : index
    %39 = vector.load %arg12[%c0_28, %c0_29] : memref<8x256xf32, #tpu.memory_space<vmem>>, vector<8x256xf32>
    tpu.vector_store %arg12[%c0_28, %c0_29], %13 {strides = array<i32>} : memref<8x256xf32, #tpu.memory_space<vmem>>, vector<8x256xf32>,
    return
  }
  func.func @transform_0(%arg0: i32) -> (i32, i32) {
    %c0_i32 = arith.constant 0 : i32
    %c0_i32_0 = arith.constant 0 : i32
    return %arg0, %c0_i32 : i32, i32
  }
  func.func @transform_1(%arg0: i32) -> (i32, i32) {
    %c0_i32 = arith.constant 0 : i32
    %c0_i32_0 = arith.constant 0 : i32
    return %arg0, %c0_i32 : i32, i32
  }
  func.func @transform_2(%arg0: i32) -> (i32, i32) {
    %c0_i32 = arith.constant 0 : i32
    %c0_i32_0 = arith.constant 0 : i32
    %c0_i32_1 = arith.constant 0 : i32
    return %c0_i32, %c0_i32_0 : i32, i32
  }
  func.func @transform_3(%arg0: i32) -> (i32, i32) {
    %c0_i32 = arith.constant 0 : i32
    %c0_i32_0 = arith.constant 0 : i32
    %c0_i32_1 = arith.constant 0 : i32
    return %c0_i32, %c0_i32_0 : i32, i32
  }
  func.func @transform_4(%arg0: i32) -> (i32, i32) {
    %c0_i32 = arith.constant 0 : i32
    %c0_i32_0 = arith.constant 0 : i32
    %c0_i32_1 = arith.constant 0 : i32
    return %c0_i32, %c0_i32_0 : i32, i32
  }
  func.func @transform_5(%arg0: i32) -> (i32, i32) {
    %c0_i32 = arith.constant 0 : i32
    %c0_i32_0 = arith.constant 0 : i32
    %c0_i32_1 = arith.constant 0 : i32
    return %c0_i32, %c0_i32_0 : i32, i32
  }
  func.func @transform_6(%arg0: i32) -> (i32, i32) {
    %c0_i32 = arith.constant 0 : i32
    %c0_i32_0 = arith.constant 0 : i32
    %c0_i32_1 = arith.constant 0 : i32
    return %c0_i32, %c0_i32_0 : i32, i32
  }
  func.func @transform_7(%arg0: i32) -> (i32, i32) {
    %c0_i32 = arith.constant 0 : i32
    %c0_i32_0 = arith.constant 0 : i32
    %c0_i32_1 = arith.constant 0 : i32
    return %c0_i32, %c0_i32_0 : i32, i32
  }
  func.func @transform_8(%arg0: i32) -> (i32, i32) {
    %c0_i32 = arith.constant 0 : i32
    %c0_i32_0 = arith.constant 0 : i32
    %c0_i32_1 = arith.constant 0 : i32
    return %c0_i32, %c0_i32_0 : i32, i32
  }
  func.func @transform_9(%arg0: i32) -> (i32, i32) {
    %c0_i32 = arith.constant 0 : i32
    %c0_i32_0 = arith.constant 0 : i32
    %c0_i32_1 = arith.constant 0 : i32
    return %c0_i32, %c0_i32_0 : i32, i32
  }
  func.func @transform_10(%arg0: i32) -> (i32, i32) {
    %c0_i32 = arith.constant 0 : i32
    %c0_i32_0 = arith.constant 0 : i32
    return %arg0, %c0_i32 : i32, i32
  }
  func.func @transform_11(%arg0: i32) -> (i32, i32) {
    %c0_i32 = arith.constant 0 : i32
    %c0_i32_0 = arith.constant 0 : i32
    return %arg0, %c0_i32 : i32, i32
  }
}

</mosaic_0001>

<llo_original>
// kernel: tpu_custom_call.1
$region0: #{tpu_custom_call.1}
  #allocation0 [shape = 'u32[]', space=smem, size = 0x4, offset = 0x4, fixed_abs, tag = 'smem constant byte address 0x4 - core index']
  #allocation1 [shape = 'u32[144,128]{1,0:T(1,128)}', space=vmem, size = 0x12000, scoped, tag = 'internal scratch']
  %s0 = inlined_call_operand.hbm [shape: f32[16,256], index: 0, kind: input, shape index: {}]
  %s1 = inlined_call_operand.hbm [shape: f32[16,128], index: 1, kind: input, shape index: {}]
  %s2 = inlined_call_operand.hbm [shape: f32[256,128], index: 2, kind: input, shape index: {}]
  %s3 = inlined_call_operand.vmem [shape: f32[1,128], index: 3, kind: input, shape index: {}]
  %s4 = inlined_call_operand.hbm [shape: f32[128,256], index: 4, kind: input, shape index: {}]
  %s5 = inlined_call_operand.vmem [shape: f32[1,256], index: 5, kind: input, shape index: {}]
  %s6 = inlined_call_operand.hbm [shape: f32[128,128], index: 6, kind: input, shape index: {}]
  %s7 = inlined_call_operand.vmem [shape: f32[1,128], index: 7, kind: input, shape index: {}]
  %s8 = inlined_call_operand.hbm [shape: f32[128,256], index: 8, kind: input, shape index: {}]
  %s9 = inlined_call_operand.vmem [shape: f32[1,256], index: 9, kind: input, shape index: {}]
  %s10 = inlined_call_operand.hbm [shape: f32[16,256], index: 10, kind: output, shape index: {0}]
  %s11 = inlined_call_operand.hbm [shape: f32[16,256], index: 11, kind: output, shape index: {1}]
  %12 = xla_tuple %s10, %s11
  %s13 = sld [smem:[#allocation0]]
  $region105: #{tpu_custom_call.1} parent=0
    _
  %s15 = ssub.s32 1, %s13
  %s16 = scalar_select 0, %s15, %s13
  $region1: #{tpu_custom_call.1} parent=0
    #allocation2 [shape = 'u8[16384]{0}', space=vmem, size = 0x4000, scoped, tag = 'input window, operand 0']
    #allocation3 [shape = 's32[2]{0}', space=sflag, size = 0x8, scoped, tag = 'scoped memory for tpu_custom_call.1']
    #allocation4 [shape = 's32[2]{0}', space=sflag, size = 0x8, scoped, tag = 'scoped memory for tpu_custom_call.1']
    #allocation5 [shape = 'u8[8192]{0}', space=vmem, size = 0x2000, scoped, tag = 'input window, operand 1']
    #allocation6 [shape = 's32[2]{0}', space=sflag, size = 0x8, scoped, tag = 'scoped memory for tpu_custom_call.1']
    #allocation7 [shape = 'u8[131072]{0}', space=vmem, size = 0x20000, scoped, tag = 'input window, operand 2, single buffered']
    #allocation8 [shape = 'u8[131072]{0}', space=vmem, size = 0x20000, scoped, tag = 'input window, operand 4, single buffered']
    #allocation9 [shape = 's32[1]{0}', space=sflag, size = 0x4, scoped, tag = 'scoped memory for tpu_custom_call.1']
    #allocation10 [shape = 'u8[65536]{0}', space=vmem, size = 0x10000, scoped, tag = 'input window, operand 6, single buffered']
    #allocation11 [shape = 'u8[131072]{0}', space=vmem, size = 0x20000, scoped, tag = 'input window, operand 8, single buffered']
    #allocation12 [shape = 's32[1]{0}', space=sflag, size = 0x4, scoped, tag = 'scoped memory for tpu_custom_call.1']
    #allocation13 [shape = 'u8[16384]{0}', space=vmem, size = 0x4000, scoped, tag = 'output window, operand 0']
    #allocation14 [shape = 'u8[16384]{0}', space=vmem, size = 0x4000, scoped, tag = 'output window, operand 1']
    #allocation15 [shape = 's32[2]{0}', space=sflag, size = 0x8, scoped, tag = 'scoped memory for tpu_custom_call.1']
    %17 = vsyncpa [#allocation3], 0
    %s18 = scalar_lea.sflag [#allocation3], 1
    %19 = vsyncpa %s18, 0
    %20 = vsyncpa [#allocation6], 0
    %s21 = scalar_lea.sflag [#allocation6], 1
    %22 = vsyncpa %s21, 0
    %23 = vsyncpa [#allocation9], 0
    %24 = vsyncpa [#allocation12], 0
    %25 = vsyncpa [#allocation4], 0
    %s26 = scalar_lea.sflag [#allocation4], 1
    %27 = vsyncpa %s26, 0
    %28 = vsyncpa [#allocation15], 0
    %s29 = scalar_lea.sflag [#allocation15], 1
    %30 = vsyncpa %s29, 0
    loop: start=0, step=1, limit=4
    $region2: #{tpu_custom_call.1} parent=1 // loop_pre_header
      _
    $region3: #{tpu_custom_call.1} parent=1 // loop_header
      %s32 = sphi 0, %s36
      %p33 = scmp.ge.s32.totalorder %s32, 4
      %s42 = sphi 0, %s44
      %s45 = sphi 0, %s42
      %s46 = sphi 0, %s45
      %s62 = sphi 0, %s46
      %s68 = sphi 0, %s70
      %s71 = sphi 0, %s68
      %s72 = sphi 0, %s71
      %s88 = sphi 0, %s72
      %s92 = sphi 0, %s92
      %s94 = sphi 0, %s92
      %s95 = sphi 0, %s94
      %s109 = sphi 0, %s95
      %s113 = sphi 0, %s113
      %s115 = sphi 0, %s113
      %s116 = sphi 0, %s115
      %s130 = sphi 0, %s116
      %s134 = sphi 0, %s134
      %s136 = sphi 0, %s134
      %s137 = sphi 0, %s136
      %s151 = sphi 0, %s137
      %s155 = sphi 0, %s155
      %s157 = sphi 0, %s155
      %s158 = sphi 0, %s157
      %s172 = sphi 0, %s158
      %s176 = sphi 0, %s176
      %s178 = sphi 0, %s176
      %s179 = sphi 0, %s178
      %s193 = sphi 0, %s179
      %s197 = sphi 0, %s197
      %s199 = sphi 0, %s197
      %s200 = sphi 0, %s199
      %s214 = sphi 0, %s200
      %s218 = sphi 0, %s218
      %s220 = sphi 0, %s218
      %s221 = sphi 0, %s220
      %s235 = sphi 0, %s221
      %s239 = sphi 0, %s239
      %s241 = sphi 0, %s239
      %s242 = sphi 0, %s241
      %s256 = sphi 0, %s242
      %s262 = sphi 0, %s264
      %s265 = sphi 0, %s262
      %s266 = sphi 0, %s265
      %s282 = sphi 0, %s266
      %s288 = sphi 0, %s290
      %s291 = sphi 0, %s288
      %s292 = sphi 0, %s291
      %s308 = sphi 0, %s292
    $region4: #{tpu_custom_call.1} parent=1 // loop_header_branch
      %35 = sbr.rel (%p33) target = $region8
    $region5: #{tpu_custom_call.1} parent=1 // loop_body
      %s37 = ssub.s32 %s32, 1
      %s38 = ssub.s32 %s32, 2
      %s39 = sadd.s32 %s32, 1
      %s40 = ssub.s32 %s32, %s39
      %p41 = scmp.eq.s32.totalorder %s40, 0
      %s43 = sadd.s32 %s42, 1
      %s44 = scalar_select %p41, %s42, %s43
      %p47 = pneg %p41
      %p48 = scmp.eq.s32.totalorder %s32, 1
      %p49 = por %p47, %p48
      %p50 = scmp.ne.s32.totalorder %s42, %s45
      %p51 = scmp.eq.s32.totalorder %s32, 0
      %p52 = por %p50, %p51
      %p53 = scmp.ne.s32.totalorder %s42, %s45
      %p54 = scmp.eq.s32.totalorder %s37, 1
      %p55 = por %p53, %p54
      %p56 = scmp.ne.s32.totalorder %s45, %s46
      %p57 = scmp.eq.s32.totalorder %s37, 0
      %p58 = por %p56, %p57
      %p59 = scmp.ne.s32.totalorder %s45, %s46
      %p60 = scmp.eq.s32.totalorder %s38, 1
      %p61 = por %p59, %p60
      %p63 = scmp.ne.s32.totalorder %s46, %s62
      %p64 = scmp.eq.s32.totalorder %s38, 0
      %p65 = por %p63, %p64
      %s66 = ssub.s32 %s32, %s39
      %p67 = scmp.eq.s32.totalorder %s66, 0
      %s69 = sadd.s32 %s68, 1
      %s70 = scalar_select %p67, %s68, %s69
      %p73 = pneg %p67
      %p74 = scmp.eq.s32.totalorder %s32, 1
      %p75 = por %p73, %p74
      %p76 = scmp.ne.s32.totalorder %s68, %s71
      %p77 = scmp.eq.s32.totalorder %s32, 0
      %p78 = por %p76, %p77
      %p79 = scmp.ne.s32.totalorder %s68, %s71
      %p80 = scmp.eq.s32.totalorder %s37, 1
      %p81 = por %p79, %p80
      %p82 = scmp.ne.s32.totalorder %s71, %s72
      %p83 = scmp.eq.s32.totalorder %s37, 0
      %p84 = por %p82, %p83
      %p85 = scmp.ne.s32.totalorder %s71, %s72
      %p86 = scmp.eq.s32.totalorder %s38, 1
      %p87 = por %p85, %p86
      %p89 = scmp.ne.s32.totalorder %s72, %s88
      %p90 = scmp.eq.s32.totalorder %s38, 0
      %p91 = por %p89, %p90
      %s93 = sadd.s32 %s92, 1
      %p96 = scmp.eq.s32.totalorder %s32, 1
      %p97 = scmp.ne.s32.totalorder %s92, %s94
      %p98 = scmp.eq.s32.totalorder %s32, 0
      %p99 = por %p97, %p98
      %p100 = scmp.ne.s32.totalorder %s92, %s94
      %p101 = scmp.eq.s32.totalorder %s37, 1
      %p102 = por %p100, %p101
      %p103 = scmp.ne.s32.totalorder %s94, %s95
      %p104 = scmp.eq.s32.totalorder %s37, 0
      %p105 = por %p103, %p104
      %p106 = scmp.ne.s32.totalorder %s94, %s95
      %p107 = scmp.eq.s32.totalorder %s38, 1
      %p108 = por %p106, %p107
      %p110 = scmp.ne.s32.totalorder %s95, %s109
      %p111 = scmp.eq.s32.totalorder %s38, 0
      %p112 = por %p110, %p111
      %s114 = sadd.s32 %s113, 1
      %p117 = scmp.eq.s32.totalorder %s32, 1
      %p118 = scmp.ne.s32.totalorder %s113, %s115
      %p119 = scmp.eq.s32.totalorder %s32, 0
      %p120 = por %p118, %p119
      %p121 = scmp.ne.s32.totalorder %s113, %s115
      %p122 = scmp.eq.s32.totalorder %s37, 1
      %p123 = por %p121, %p122
      %p124 = scmp.ne.s32.totalorder %s115, %s116
      %p125 = scmp.eq.s32.totalorder %s37, 0
      %p126 = por %p124, %p125
      %p127 = scmp.ne.s32.totalorder %s115, %s116
      %p128 = scmp.eq.s32.totalorder %s38, 1
      %p129 = por %p127, %p128
      %p131 = scmp.ne.s32.totalorder %s116, %s130
      %p132 = scmp.eq.s32.totalorder %s38, 0
      %p133 = por %p131, %p132
      %s135 = sadd.s32 %s134, 1
      %p138 = scmp.eq.s32.totalorder %s32, 1
      %p139 = scmp.ne.s32.totalorder %s134, %s136
      %p140 = scmp.eq.s32.totalorder %s32, 0
      %p141 = por %p139, %p140
      %p142 = scmp.ne.s32.totalorder %s134, %s136
      %p143 = scmp.eq.s32.totalorder %s37, 1
      %p144 = por %p142, %p143
      %p145 = scmp.ne.s32.totalorder %s136, %s137
      %p146 = scmp.eq.s32.totalorder %s37, 0
      %p147 = por %p145, %p146
      %p148 = scmp.ne.s32.totalorder %s136, %s137
      %p149 = scmp.eq.s32.totalorder %s38, 1
      %p150 = por %p148, %p149
      %p152 = scmp.ne.s32.totalorder %s137, %s151
      %p153 = scmp.eq.s32.totalorder %s38, 0
      %p154 = por %p152, %p153
      %s156 = sadd.s32 %s155, 1
      %p159 = scmp.eq.s32.totalorder %s32, 1
      %p160 = scmp.ne.s32.totalorder %s155, %s157
      %p161 = scmp.eq.s32.totalorder %s32, 0
      %p162 = por %p160, %p161
      %p163 = scmp.ne.s32.totalorder %s155, %s157
      %p164 = scmp.eq.s32.totalorder %s37, 1
      %p165 = por %p163, %p164
      %p166 = scmp.ne.s32.totalorder %s157, %s158
      %p167 = scmp.eq.s32.totalorder %s37, 0
      %p168 = por %p166, %p167
      %p169 = scmp.ne.s32.totalorder %s157, %s158
      %p170 = scmp.eq.s32.totalorder %s38, 1
      %p171 = por %p169, %p170
      %p173 = scmp.ne.s32.totalorder %s158, %s172
      %p174 = scmp.eq.s32.totalorder %s38, 0
      %p175 = por %p173, %p174
      %s177 = sadd.s32 %s176, 1
      %p180 = scmp.eq.s32.totalorder %s32, 1
      %p181 = scmp.ne.s32.totalorder %s176, %s178
      %p182 = scmp.eq.s32.totalorder %s32, 0
      %p183 = por %p181, %p182
      %p184 = scmp.ne.s32.totalorder %s176, %s178
      %p185 = scmp.eq.s32.totalorder %s37, 1
      %p186 = por %p184, %p185
      %p187 = scmp.ne.s32.totalorder %s178, %s179
      %p188 = scmp.eq.s32.totalorder %s37, 0
      %p189 = por %p187, %p188
      %p190 = scmp.ne.s32.totalorder %s178, %s179
      %p191 = scmp.eq.s32.totalorder %s38, 1
      %p192 = por %p190, %p191
      %p194 = scmp.ne.s32.totalorder %s179, %s193
      %p195 = scmp.eq.s32.totalorder %s38, 0
      %p196 = por %p194, %p195
      %s198 = sadd.s32 %s197, 1
      %p201 = scmp.eq.s32.totalorder %s32, 1
      %p202 = scmp.ne.s32.totalorder %s197, %s199
      %p203 = scmp.eq.s32.totalorder %s32, 0
      %p204 = por %p202, %p203
      %p205 = scmp.ne.s32.totalorder %s197, %s199
      %p206 = scmp.eq.s32.totalorder %s37, 1
      %p207 = por %p205, %p206
      %p208 = scmp.ne.s32.totalorder %s199, %s200
      %p209 = scmp.eq.s32.totalorder %s37, 0
      %p210 = por %p208, %p209
      %p211 = scmp.ne.s32.totalorder %s199, %s200
      %p212 = scmp.eq.s32.totalorder %s38, 1
      %p213 = por %p211, %p212
      %p215 = scmp.ne.s32.totalorder %s200, %s214
      %p216 = scmp.eq.s32.totalorder %s38, 0
      %p217 = por %p215, %p216
      %s219 = sadd.s32 %s218, 1
      %p222 = scmp.eq.s32.totalorder %s32, 1
      %p223 = scmp.ne.s32.totalorder %s218, %s220
      %p224 = scmp.eq.s32.totalorder %s32, 0
      %p225 = por %p223, %p224
      %p226 = scmp.ne.s32.totalorder %s218, %s220
      %p227 = scmp.eq.s32.totalorder %s37, 1
      %p228 = por %p226, %p227
      %p229 = scmp.ne.s32.totalorder %s220, %s221
      %p230 = scmp.eq.s32.totalorder %s37, 0
      %p231 = por %p229, %p230
      %p232 = scmp.ne.s32.totalorder %s220, %s221
      %p233 = scmp.eq.s32.totalorder %s38, 1
      %p234 = por %p232, %p233
      %p236 = scmp.ne.s32.totalorder %s221, %s235
      %p237 = scmp.eq.s32.totalorder %s38, 0
      %p238 = por %p236, %p237
      %s240 = sadd.s32 %s239, 1
      %p243 = scmp.eq.s32.totalorder %s32, 1
      %p244 = scmp.ne.s32.totalorder %s239, %s241
      %p245 = scmp.eq.s32.totalorder %s32, 0
      %p246 = por %p244, %p245
      %p247 = scmp.ne.s32.totalorder %s239, %s241
      %p248 = scmp.eq.s32.totalorder %s37, 1
      %p249 = por %p247, %p248
      %p250 = scmp.ne.s32.totalorder %s241, %s242
      %p251 = scmp.eq.s32.totalorder %s37, 0
      %p252 = por %p250, %p251
      %p253 = scmp.ne.s32.totalorder %s241, %s242
      %p254 = scmp.eq.s32.totalorder %s38, 1
      %p255 = por %p253, %p254
      %p257 = scmp.ne.s32.totalorder %s242, %s256
      %p258 = scmp.eq.s32.totalorder %s38, 0
      %p259 = por %p257, %p258
      %s260 = ssub.s32 %s32, %s39
      %p261 = scmp.eq.s32.totalorder %s260, 0
      %s263 = sadd.s32 %s262, 1
      %s264 = scalar_select %p261, %s262, %s263
      %p267 = pneg %p261
      %p268 = scmp.eq.s32.totalorder %s32, 1
      %p269 = por %p267, %p268
      %p270 = scmp.ne.s32.totalorder %s262, %s265
      %p271 = scmp.eq.s32.totalorder %s32, 0
      %p272 = por %p270, %p271
      %p273 = scmp.ne.s32.totalorder %s262, %s265
      %p274 = scmp.eq.s32.totalorder %s37, 1
      %p275 = por %p273, %p274
      %p276 = scmp.ne.s32.totalorder %s265, %s266
      %p277 = scmp.eq.s32.totalorder %s37, 0
      %p278 = por %p276, %p277
      %p279 = scmp.ne.s32.totalorder %s265, %s266
      %p280 = scmp.eq.s32.totalorder %s38, 1
      %p281 = por %p279, %p280
      %p283 = scmp.ne.s32.totalorder %s266, %s282
      %p284 = scmp.eq.s32.totalorder %s38, 0
      %p285 = por %p283, %p284
      %s286 = ssub.s32 %s32, %s39
      %p287 = scmp.eq.s32.totalorder %s286, 0
      %s289 = sadd.s32 %s288, 1
      %s290 = scalar_select %p287, %s288, %s289
      %p293 = pneg %p287
      %p294 = scmp.eq.s32.totalorder %s32, 1
      %p295 = por %p293, %p294
      %p296 = scmp.ne.s32.totalorder %s288, %s291
      %p297 = scmp.eq.s32.totalorder %s32, 0
      %p298 = por %p296, %p297
      %p299 = scmp.ne.s32.totalorder %s288, %s291
      %p300 = scmp.eq.s32.totalorder %s37, 1
      %p301 = por %p299, %p300
      %p302 = scmp.ne.s32.totalorder %s291, %s292
      %p303 = scmp.eq.s32.totalorder %s37, 0
      %p304 = por %p302, %p303
      %p305 = scmp.ne.s32.totalorder %s291, %s292
      %p306 = scmp.eq.s32.totalorder %s38, 1
      %p307 = por %p305, %p306
      %p309 = scmp.ne.s32.totalorder %s292, %s308
      %p310 = scmp.eq.s32.totalorder %s38, 0
      %p311 = por %p309, %p310
      %p312 = scmp.le.s32.totalorder 1, %s32
      %p313 = scmp.lt.s32.totalorder %s32, 3
      %p314 = pnand %p312, %p313
      %p315 = pneg %p314
      // Predicated region
      $region9: #{tpu_custom_call.1} parent=5 // pred_check
        _
      $region10: #{tpu_custom_call.1} parent=5 // pred_check_branch
        %317 = sbr.rel (%p314) target = $region12
      $region11: #{tpu_custom_call.1} parent=5 // pred_region
        %s318 = ssub.s32 %s32, 1
        // Predicated region
        $region13: #{tpu_custom_call.1} parent=11 // pred_check
          %p319 = pneg %p105
        $region14: #{tpu_custom_call.1} parent=11 // pred_check_branch
          %321 = sbr.rel (%p319) target = $region16
        $region15: #{tpu_custom_call.1} parent=11 // pred_region
          %s323 = ssub.s32 4096, 4096
          %324 = vsyncadd [#allocation6], %s323
          %s325 = sshll.u32 [#allocation7], 4
          %s326 = int_to_ptr.vmem [resolvable:$true] %s325
          %331 = dma.hbm_to_vmem [thread:$0]  %s2, 4096, %s326, [#allocation6], 128, 128, 8
        $region16: #{tpu_custom_call.1} parent=11 // pred_fallthru
          _
        // Predicated region
        $region17: #{tpu_custom_call.1} parent=11 // pred_check
          %p332 = pneg %p126
        $region18: #{tpu_custom_call.1} parent=11 // pred_check_branch
          %334 = sbr.rel (%p332) target = $region20
        $region19: #{tpu_custom_call.1} parent=11 // pred_region
          _
        $region20: #{tpu_custom_call.1} parent=11 // pred_fallthru
          _
        // Predicated region
        $region21: #{tpu_custom_call.1} parent=11 // pred_check
          %p335 = pneg %p147
        $region22: #{tpu_custom_call.1} parent=11 // pred_check_branch
          %337 = sbr.rel (%p335) target = $region24
        $region23: #{tpu_custom_call.1} parent=11 // pred_region
          %s339 = ssub.s32 4096, 4096
          %340 = vsyncadd [#allocation9], %s339
          %s341 = sshll.u32 [#allocation8], 4
          %s342 = int_to_ptr.vmem [resolvable:$true] %s341
          %347 = dma.hbm_to_vmem [thread:$0]  %s4, 4096, %s342, [#allocation9], 256, 256, 16
        $region24: #{tpu_custom_call.1} parent=11 // pred_fallthru
          _
        // Predicated region
        $region25: #{tpu_custom_call.1} parent=11 // pred_check
          %p348 = pneg %p168
        $region26: #{tpu_custom_call.1} parent=11 // pred_check_branch
          %350 = sbr.rel (%p348) target = $region28
        $region27: #{tpu_custom_call.1} parent=11 // pred_region
          _
        $region28: #{tpu_custom_call.1} parent=11 // pred_fallthru
          _
        // Predicated region
        $region29: #{tpu_custom_call.1} parent=11 // pred_check
          %p351 = pneg %p189
        $region30: #{tpu_custom_call.1} parent=11 // pred_check_branch
          %353 = sbr.rel (%p351) target = $region32
        $region31: #{tpu_custom_call.1} parent=11 // pred_region
          %s355 = ssub.s32 2048, 2048
          %356 = vsyncadd [#allocation9], %s355
          %s357 = sshll.u32 [#allocation10], 4
          %s358 = int_to_ptr.vmem [resolvable:$true] %s357
          %363 = dma.hbm_to_vmem [thread:$0]  %s6, 2048, %s358, [#allocation9], 128, 128, 8
        $region32: #{tpu_custom_call.1} parent=11 // pred_fallthru
          _
        // Predicated region
        $region33: #{tpu_custom_call.1} parent=11 // pred_check
          %p364 = pneg %p210
        $region34: #{tpu_custom_call.1} parent=11 // pred_check_branch
          %366 = sbr.rel (%p364) target = $region36
        $region35: #{tpu_custom_call.1} parent=11 // pred_region
          _
        $region36: #{tpu_custom_call.1} parent=11 // pred_fallthru
          _
        // Predicated region
        $region37: #{tpu_custom_call.1} parent=11 // pred_check
          %p367 = pneg %p231
        $region38: #{tpu_custom_call.1} parent=11 // pred_check_branch
          %369 = sbr.rel (%p367) target = $region40
        $region39: #{tpu_custom_call.1} parent=11 // pred_region
          %s371 = ssub.s32 4096, 4096
          %372 = vsyncadd [#allocation12], %s371
          %s373 = sshll.u32 [#allocation11], 4
          %s374 = int_to_ptr.vmem [resolvable:$true] %s373
          %379 = dma.hbm_to_vmem [thread:$0]  %s8, 4096, %s374, [#allocation12], 256, 256, 16
        $region40: #{tpu_custom_call.1} parent=11 // pred_fallthru
          _
        // Predicated region
        $region41: #{tpu_custom_call.1} parent=11 // pred_check
          %p380 = pneg %p252
        $region42: #{tpu_custom_call.1} parent=11 // pred_check_branch
          %382 = sbr.rel (%p380) target = $region44
        $region43: #{tpu_custom_call.1} parent=11 // pred_region
          _
        $region44: #{tpu_custom_call.1} parent=11 // pred_fallthru
          _
      $region12: #{tpu_custom_call.1} parent=5 // pred_fallthru
        _
      %p383 = scmp.lt.s32.totalorder %s32, 2
      // Predicated region
      $region45: #{tpu_custom_call.1} parent=5 // pred_check
        %p384 = pneg %p383
      $region46: #{tpu_custom_call.1} parent=5 // pred_check_branch
        %386 = sbr.rel (%p384) target = $region48
      $region47: #{tpu_custom_call.1} parent=5 // pred_region
        // Predicated region
        $region49: #{tpu_custom_call.1} parent=47 // pred_check
          %p387 = pneg %p52
        $region50: #{tpu_custom_call.1} parent=47 // pred_check_branch
          %389 = sbr.rel (%p387) target = $region52
        $region51: #{tpu_custom_call.1} parent=47 // pred_region
          %s390 = sand.u32 %s42, 1
          %s391 = scalar_lea.sflag [#allocation3], %s390
          %s392 = sand.u32 %s42, 1
          %s393 = smul.addr %s392, 16
          %s394 = scalar_lea.vmem [#allocation2], %s393
          %s396 = ssub.s32 256, 256
          %397 = vsyncadd %s391, %s396
          %s398 = smul.addr %s32, 2
          %s399 = smul.addr %s398, 128
          %s400 = scalar_lea.hbm %s0, %s399
          %s402 = sshll.u32 %s394, 4
          %s403 = int_to_ptr.vmem [resolvable:$true] %s402
          %405 = dma.hbm_to_vmem [thread:$0]  %s400, 256, %s403, %s391
        $region52: #{tpu_custom_call.1} parent=47 // pred_fallthru
          _
        // Predicated region
        $region53: #{tpu_custom_call.1} parent=47 // pred_check
          %p406 = pneg %p78
        $region54: #{tpu_custom_call.1} parent=47 // pred_check_branch
          %408 = sbr.rel (%p406) target = $region56
        $region55: #{tpu_custom_call.1} parent=47 // pred_region
          %s409 = sand.u32 %s32, 1
          %s410 = scalar_lea.sflag [#allocation6], %s409
          %s411 = sand.u32 %s68, 1
          %s412 = smul.addr %s411, 8
          %s413 = scalar_lea.vmem [#allocation5], %s412
          %s415 = ssub.s32 128, 128
          %416 = vsyncadd %s410, %s415
          %s417 = smul.addr %s32, 128
          %s418 = scalar_lea.hbm %s1, %s417
          %s420 = sshll.u32 %s413, 4
          %s421 = int_to_ptr.vmem [resolvable:$true] %s420
          %423 = dma.hbm_to_vmem [thread:$0]  %s418, 128, %s421, %s410
        $region56: #{tpu_custom_call.1} parent=47 // pred_fallthru
          _
      $region48: #{tpu_custom_call.1} parent=5 // pred_fallthru
        _
      %p424 = scmp.le.s32.totalorder 1, %s32
      %p425 = scmp.lt.s32.totalorder %s32, 3
      %p426 = pnand %p424, %p425
      %p427 = pneg %p426
      // Predicated region
      $region57: #{tpu_custom_call.1} parent=5 // pred_check
        _
      $region58: #{tpu_custom_call.1} parent=5 // pred_check_branch
        %429 = sbr.rel (%p426) target = $region60
      $region59: #{tpu_custom_call.1} parent=5 // pred_region
        %s430 = ssub.s32 %s32, 1
        %s431 = sand.u32 %s45, 1
        %s432 = scalar_lea.sflag [#allocation3], %s431
        %s433 = sand.u32 %s45, 1
        %s434 = smul.addr %s433, 16
        %s435 = scalar_lea.vmem [#allocation2], %s434
        // Predicated region
        $region61: #{tpu_custom_call.1} parent=59 // pred_check
          %p436 = pneg %p58
        $region62: #{tpu_custom_call.1} parent=59 // pred_check_branch
          %438 = sbr.rel (%p436) target = $region64
        $region63: #{tpu_custom_call.1} parent=59 // pred_region
          %439 = dma.done %s432, 256
        $region64: #{tpu_custom_call.1} parent=59 // pred_fallthru
          _
        %s440 = sand.u32 %s37, 1
        %s441 = scalar_lea.sflag [#allocation6], %s440
        %s442 = sand.u32 %s71, 1
        %s443 = smul.addr %s442, 8
        %s444 = scalar_lea.vmem [#allocation5], %s443
        // Predicated region
        $region65: #{tpu_custom_call.1} parent=59 // pred_check
          %p445 = pneg %p84
        $region66: #{tpu_custom_call.1} parent=59 // pred_check_branch
          %447 = sbr.rel (%p445) target = $region68
        $region67: #{tpu_custom_call.1} parent=59 // pred_region
          %448 = dma.done %s441, 128
        $region68: #{tpu_custom_call.1} parent=59 // pred_fallthru
          _
        // Predicated region
        $region69: #{tpu_custom_call.1} parent=59 // pred_check
          %p449 = pneg %p105
        $region70: #{tpu_custom_call.1} parent=59 // pred_check_branch
          %451 = sbr.rel (%p449) target = $region72
        $region71: #{tpu_custom_call.1} parent=59 // pred_region
          %452 = dma.done [#allocation6], 4096
        $region72: #{tpu_custom_call.1} parent=59 // pred_fallthru
          _
        // Predicated region
        $region73: #{tpu_custom_call.1} parent=59 // pred_check
          %p453 = pneg %p147
        $region74: #{tpu_custom_call.1} parent=59 // pred_check_branch
          %455 = sbr.rel (%p453) target = $region76
        $region75: #{tpu_custom_call.1} parent=59 // pred_region
          %456 = dma.done [#allocation9], 4096
        $region76: #{tpu_custom_call.1} parent=59 // pred_fallthru
          _
        // Predicated region
        $region77: #{tpu_custom_call.1} parent=59 // pred_check
          %p457 = pneg %p189
        $region78: #{tpu_custom_call.1} parent=59 // pred_check_branch
          %459 = sbr.rel (%p457) target = $region80
        $region79: #{tpu_custom_call.1} parent=59 // pred_region
          %460 = dma.done [#allocation9], 2048
        $region80: #{tpu_custom_call.1} parent=59 // pred_fallthru
          _
        // Predicated region
        $region81: #{tpu_custom_call.1} parent=59 // pred_check
          %p461 = pneg %p231
        $region82: #{tpu_custom_call.1} parent=59 // pred_check_branch
          %463 = sbr.rel (%p461) target = $region84
        $region83: #{tpu_custom_call.1} parent=59 // pred_region
          %464 = dma.done [#allocation12], 4096
        $region84: #{tpu_custom_call.1} parent=59 // pred_fallthru
          _
        %s465 = sand.u32 %s45, 1
        %s466 = scalar_lea.sflag [#allocation3], %s465
        %s467 = sand.u32 %s45, 1
        %s468 = smul.addr %s467, 16
        %s469 = scalar_lea.vmem [#allocation2], %s468
        %p470 = pneg %p58
        %p471 = pneg %p55
        %s472 = sand.u32 %s37, 1
        %s473 = scalar_lea.sflag [#allocation6], %s472
        %s474 = sand.u32 %s71, 1
        %s475 = smul.addr %s474, 8
        %s476 = scalar_lea.vmem [#allocation5], %s475
        %p477 = pneg %p84
        %p478 = pneg %p81
        %p479 = pneg %p105
        %p480 = pneg %p102
        %p481 = pneg %p126
        %p482 = pneg %p123
        %p483 = pneg %p147
        %p484 = pneg %p144
        %p485 = pneg %p168
        %p486 = pneg %p165
        %p487 = pneg %p189
        %p488 = pneg %p186
        %p489 = pneg %p210
        %p490 = pneg %p207
        %p491 = pneg %p231
        %p492 = pneg %p228
        %p493 = pneg %p252
        %p494 = pneg %p249
        %p495 = pneg %p278
        %p496 = pneg %p275
        %s497 = sand.u32 %s265, 1
        %s498 = scalar_lea.sflag [#allocation4], %s497
        %s499 = sand.u32 %s265, 1
        %s500 = smul.addr %s499, 16
        %s501 = scalar_lea.vmem [#allocation13], %s500
        %p502 = pneg %p304
        %p503 = pneg %p301
        %s504 = sand.u32 %s291, 1
        %s505 = scalar_lea.sflag [#allocation15], %s504
        %s506 = sand.u32 %s291, 1
        %s507 = smul.addr %s506, 16
        %s508 = scalar_lea.vmem [#allocation14], %s507
        %v509 = vld [vmem:[%s435] sm:$0xff]
        %v510 = vld [vmem:[%s435 + $0x8] sm:$0xff]
        %v511 = vld [vmem:[%s444] sm:$0xff]
        %v512 = vld [vmem:[#allocation7] sm:$0xff]
        %v513 = vld [vmem:[#allocation7 + $0x8] sm:$0xff]
        %v514 = vld [vmem:[#allocation7 + $0x10] sm:$0xff]
        %v515 = vld [vmem:[#allocation7 + $0x18] sm:$0xff]
        %v516 = vld [vmem:[#allocation7 + $0x20] sm:$0xff]
        %v517 = vld [vmem:[#allocation7 + $0x28] sm:$0xff]
        %v518 = vld [vmem:[#allocation7 + $0x30] sm:$0xff]
        %v519 = vld [vmem:[#allocation7 + $0x38] sm:$0xff]
        %v520 = vld [vmem:[#allocation7 + $0x40] sm:$0xff]
        %v521 = vld [vmem:[#allocation7 + $0x48] sm:$0xff]
        %v522 = vld [vmem:[#allocation7 + $0x50] sm:$0xff]
        %v523 = vld [vmem:[#allocation7 + $0x58] sm:$0xff]
        %v524 = vld [vmem:[#allocation7 + $0x60] sm:$0xff]
        %v525 = vld [vmem:[#allocation7 + $0x68] sm:$0xff]
        %v526 = vld [vmem:[#allocation7 + $0x70] sm:$0xff]
        %v527 = vld [vmem:[#allocation7 + $0x78] sm:$0xff]
        %v528 = vld [vmem:[#allocation7 + $0x80] sm:$0xff]
        %v529 = vld [vmem:[#allocation7 + $0x88] sm:$0xff]
        %v530 = vld [vmem:[#allocation7 + $0x90] sm:$0xff]
        %v531 = vld [vmem:[#allocation7 + $0x98] sm:$0xff]
        %v532 = vld [vmem:[#allocation7 + $0xa0] sm:$0xff]
        %v533 = vld [vmem:[#allocation7 + $0xa8] sm:$0xff]
        %v534 = vld [vmem:[#allocation7 + $0xb0] sm:$0xff]
        %v535 = vld [vmem:[#allocation7 + $0xb8] sm:$0xff]
        %v536 = vld [vmem:[#allocation7 + $0xc0] sm:$0xff]
        %v537 = vld [vmem:[#allocation7 + $0xc8] sm:$0xff]
        %v538 = vld [vmem:[#allocation7 + $0xd0] sm:$0xff]
        %v539 = vld [vmem:[#allocation7 + $0xd8] sm:$0xff]
        %v540 = vld [vmem:[#allocation7 + $0xe0] sm:$0xff]
        %v541 = vld [vmem:[#allocation7 + $0xe8] sm:$0xff]
        %v542 = vld [vmem:[#allocation7 + $0xf0] sm:$0xff]
        %v543 = vld [vmem:[#allocation7 + $0xf8] sm:$0xff]
        %v544 = vld [vmem:[%s3] sm:$0x1]
        %v546 = vlaneseq
        %v547 = vshrl.u32 %v546, 7
        %v548 = vsub.s32 0, %v547
        %v549 = vrot.slane %v544, %v548
        %551 = vmatprep.subr.mxu0 0.0
        %552 = vmatpush1.msra.mxu0 %v527
        %553 = vmatprep.subr.mxu0 0.0
        %554 = vmatpush1.msra.mxu0 %v526
        %555 = vmatprep.subr.mxu0 0.0
        %556 = vmatpush1.msra.mxu0 %v525
        %557 = vmatprep.subr.mxu0 0.0
        %558 = vmatpush1.msra.mxu0 %v524
        %559 = vmatprep.subr.mxu0 0.0
        %560 = vmatpush1.msra.mxu0 %v523
        %561 = vmatprep.subr.mxu0 0.0
        %562 = vmatpush1.msra.mxu0 %v522
        %563 = vmatprep.subr.mxu0 0.0
        %564 = vmatpush1.msra.mxu0 %v521
        %565 = vmatprep.subr.mxu0 0.0
        %566 = vmatpush1.msra.mxu0 %v520
        %567 = vmatprep.subr.mxu0 0.0
        %568 = vmatpush1.msra.mxu0 %v519
        %569 = vmatprep.subr.mxu0 0.0
        %570 = vmatpush1.msra.mxu0 %v518
        %571 = vmatprep.subr.mxu0 0.0
        %572 = vmatpush1.msra.mxu0 %v517
        %573 = vmatprep.subr.mxu0 0.0
        %574 = vmatpush1.msra.mxu0 %v516
        %575 = vmatprep.subr.mxu0 0.0
        %576 = vmatpush1.msra.mxu0 %v515
        %577 = vmatprep.subr.mxu0 0.0
        %578 = vmatpush1.msra.mxu0 %v514
        %579 = vmatprep.subr.mxu0 0.0
        %580 = vmatpush1.msra.mxu0 %v513
        %581 = vmatprep.subr.mxu0 0.0
        %582 = vmatpush1.msra.mxu0 %v512
        %583 = vmatprep.subr.mxu0 0.0
        %584 = vmatpush2.msra.mxu0 %v543
        %585 = vmatprep.subr.mxu0 0.0
        %586 = vmatpush2.msra.mxu0 %v542
        %587 = vmatprep.subr.mxu0 0.0
        %588 = vmatpush2.msra.mxu0 %v541
        %589 = vmatprep.subr.mxu0 0.0
        %590 = vmatpush2.msra.mxu0 %v540
        %591 = vmatprep.subr.mxu0 0.0
        %592 = vmatpush2.msra.mxu0 %v539
        %593 = vmatprep.subr.mxu0 0.0
        %594 = vmatpush2.msra.mxu0 %v538
        %595 = vmatprep.subr.mxu0 0.0
        %596 = vmatpush2.msra.mxu0 %v537
        %597 = vmatprep.subr.mxu0 0.0
        %598 = vmatpush2.msra.mxu0 %v536
        %599 = vmatprep.subr.mxu0 0.0
        %600 = vmatpush2.msra.mxu0 %v535
        %601 = vmatprep.subr.mxu0 0.0
        %602 = vmatpush2.msra.mxu0 %v534
        %603 = vmatprep.subr.mxu0 0.0
        %604 = vmatpush2.msra.mxu0 %v533
        %605 = vmatprep.subr.mxu0 0.0
        %606 = vmatpush2.msra.mxu0 %v532
        %607 = vmatprep.subr.mxu0 0.0
        %608 = vmatpush2.msra.mxu0 %v531
        %609 = vmatprep.subr.mxu0 0.0
        %610 = vmatpush2.msra.mxu0 %v530
        %611 = vmatprep.subr.mxu0 0.0
        %612 = vmatpush2.msra.mxu0 %v529
        %613 = vmatprep.subr.mxu0 0.0
        %614 = vmatpush2.msra.mxu0 %v528
        %615 = vmatprep.mubr.f32.mxu0 %v510
        %616 = vmatmul.mubr.f32.gmra.mxu0 %v509
        %v617 = vpop.f32.mrf.mxu0
        %v618 = vadd.f32 %v549, %v617
        %v619 = vpop.f32.mrf.mxu0
        %620 = vdwg.mxu0
        %v621 = vmax.f32 %v618, 0.0
        %v622 = vld [vmem:[#allocation8] sm:$0xff]
        %v623 = vld [vmem:[#allocation8 + $0x8] sm:$0xff]
        %v624 = vld [vmem:[#allocation8 + $0x10] sm:$0xff]
        %v625 = vld [vmem:[#allocation8 + $0x18] sm:$0xff]
        %v626 = vld [vmem:[#allocation8 + $0x20] sm:$0xff]
        %v627 = vld [vmem:[#allocation8 + $0x28] sm:$0xff]
        %v628 = vld [vmem:[#allocation8 + $0x30] sm:$0xff]
        %v629 = vld [vmem:[#allocation8 + $0x38] sm:$0xff]
        %v630 = vld [vmem:[#allocation8 + $0x40] sm:$0xff]
        %v631 = vld [vmem:[#allocation8 + $0x48] sm:$0xff]
        %v632 = vld [vmem:[#allocation8 + $0x50] sm:$0xff]
        %v633 = vld [vmem:[#allocation8 + $0x58] sm:$0xff]
        %v634 = vld [vmem:[#allocation8 + $0x60] sm:$0xff]
        %v635 = vld [vmem:[#allocation8 + $0x68] sm:$0xff]
        %v636 = vld [vmem:[#allocation8 + $0x70] sm:$0xff]
        %v637 = vld [vmem:[#allocation8 + $0x78] sm:$0xff]
        %v638 = vld [vmem:[#allocation8 + $0x80] sm:$0xff]
        %v639 = vld [vmem:[#allocation8 + $0x88] sm:$0xff]
        %v640 = vld [vmem:[#allocation8 + $0x90] sm:$0xff]
        %v641 = vld [vmem:[#allocation8 + $0x98] sm:$0xff]
        %v642 = vld [vmem:[#allocation8 + $0xa0] sm:$0xff]
        %v643 = vld [vmem:[#allocation8 + $0xa8] sm:$0xff]
        %v644 = vld [vmem:[#allocation8 + $0xb0] sm:$0xff]
        %v645 = vld [vmem:[#allocation8 + $0xb8] sm:$0xff]
        %v646 = vld [vmem:[#allocation8 + $0xc0] sm:$0xff]
        %v647 = vld [vmem:[#allocation8 + $0xc8] sm:$0xff]
        %v648 = vld [vmem:[#allocation8 + $0xd0] sm:$0xff]
        %v649 = vld [vmem:[#allocation8 + $0xd8] sm:$0xff]
        %v650 = vld [vmem:[#allocation8 + $0xe0] sm:$0xff]
        %v651 = vld [vmem:[#allocation8 + $0xe8] sm:$0xff]
        %v652 = vld [vmem:[#allocation8 + $0xf0] sm:$0xff]
        %v653 = vld [vmem:[#allocation8 + $0xf8] sm:$0xff]
        %v654 = vld [vmem:[%s5] sm:$0x3]
        %v656 = vlaneseq
        %v657 = vshrl.u32 %v656, 7
        %v658 = vsub.s32 0, %v657
        %v659 = vrot.slane %v654, %v658
        %v660 = vlaneseq
        %v661 = vshrl.u32 %v660, 7
        %v662 = vsub.s32 1, %v661
        %v663 = vrot.slane %v654, %v662
        %666 = vmatprep.subr.mxu0 %v653
        %667 = vmatpush1.msra.mxu0 %v652
        %668 = vmatprep.subr.mxu0 %v651
        %669 = vmatpush1.msra.mxu0 %v650
        %670 = vmatprep.subr.mxu0 %v649
        %671 = vmatpush1.msra.mxu0 %v648
        %672 = vmatprep.subr.mxu0 %v647
        %673 = vmatpush1.msra.mxu0 %v646
        %674 = vmatprep.subr.mxu0 %v645
        %675 = vmatpush1.msra.mxu0 %v644
        %676 = vmatprep.subr.mxu0 %v643
        %677 = vmatpush1.msra.mxu0 %v642
        %678 = vmatprep.subr.mxu0 %v641
        %679 = vmatpush1.msra.mxu0 %v640
        %680 = vmatprep.subr.mxu0 %v639
        %681 = vmatpush1.msra.mxu0 %v638
        %682 = vmatprep.subr.mxu0 %v637
        %683 = vmatpush1.msra.mxu0 %v636
        %684 = vmatprep.subr.mxu0 %v635
        %685 = vmatpush1.msra.mxu0 %v634
        %686 = vmatprep.subr.mxu0 %v633
        %687 = vmatpush1.msra.mxu0 %v632
        %688 = vmatprep.subr.mxu0 %v631
        %689 = vmatpush1.msra.mxu0 %v630
        %690 = vmatprep.subr.mxu0 %v629
        %691 = vmatpush1.msra.mxu0 %v628
        %692 = vmatprep.subr.mxu0 %v627
        %693 = vmatpush1.msra.mxu0 %v626
        %694 = vmatprep.subr.mxu0 %v625
        %695 = vmatpush1.msra.mxu0 %v624
        %696 = vmatprep.subr.mxu0 %v623
        %697 = vmatpush1.msra.mxu0 %v622
        %698 = vmatprep.subr.mxu0 0.0
        %699 = vmatpush2.msra.mxu0 0.0
        %700 = vmatprep.subr.mxu0 0.0
        %701 = vmatpush2.msra.mxu0 0.0
        %702 = vmatprep.subr.mxu0 0.0
        %703 = vmatpush2.msra.mxu0 0.0
        %704 = vmatprep.subr.mxu0 0.0
        %705 = vmatpush2.msra.mxu0 0.0
        %706 = vmatprep.subr.mxu0 0.0
        %707 = vmatpush2.msra.mxu0 0.0
        %708 = vmatprep.subr.mxu0 0.0
        %709 = vmatpush2.msra.mxu0 0.0
        %710 = vmatprep.subr.mxu0 0.0
        %711 = vmatpush2.msra.mxu0 0.0
        %712 = vmatprep.subr.mxu0 0.0
        %713 = vmatpush2.msra.mxu0 0.0
        %714 = vmatprep.subr.mxu0 0.0
        %715 = vmatpush2.msra.mxu0 0.0
        %716 = vmatprep.subr.mxu0 0.0
        %717 = vmatpush2.msra.mxu0 0.0
        %718 = vmatprep.subr.mxu0 0.0
        %719 = vmatpush2.msra.mxu0 0.0
        %720 = vmatprep.subr.mxu0 0.0
        %721 = vmatpush2.msra.mxu0 0.0
        %722 = vmatprep.subr.mxu0 0.0
        %723 = vmatpush2.msra.mxu0 0.0
        %724 = vmatprep.subr.mxu0 0.0
        %725 = vmatpush2.msra.mxu0 0.0
        %726 = vmatprep.subr.mxu0 0.0
        %727 = vmatpush2.msra.mxu0 0.0
        %728 = vmatprep.subr.mxu0 0.0
        %729 = vmatpush2.msra.mxu0 0.0
        %730 = vmatprep.mubr.f32.mxu0 0.0
        %731 = vmatmul.mubr.f32.gmra.mxu0 %v621
        %v732 = vpop.f32.mrf.mxu0
        %v733 = vadd.f32 %v659, %v732
        %v734 = vpop.f32.mrf.mxu0
        %v735 = vadd.f32 %v663, %v734
        %736 = vdwg.mxu0
        %v737 = vmul.f32 %v735, 0.5
        %v738 = vmul.f32 %v737, 1.442695
        %v739 = vpow.pop %v738
        %v740 = vmul.f32 %v511, %v739
        %v741 = vadd.f32 %v733, %v740
        %v742 = vld [vmem:[#allocation10] sm:$0xff]
        %v743 = vld [vmem:[#allocation10 + $0x8] sm:$0xff]
        %v744 = vld [vmem:[#allocation10 + $0x10] sm:$0xff]
        %v745 = vld [vmem:[#allocation10 + $0x18] sm:$0xff]
        %v746 = vld [vmem:[#allocation10 + $0x20] sm:$0xff]
        %v747 = vld [vmem:[#allocation10 + $0x28] sm:$0xff]
        %v748 = vld [vmem:[#allocation10 + $0x30] sm:$0xff]
        %v749 = vld [vmem:[#allocation10 + $0x38] sm:$0xff]
        %v750 = vld [vmem:[#allocation10 + $0x40] sm:$0xff]
        %v751 = vld [vmem:[#allocation10 + $0x48] sm:$0xff]
        %v752 = vld [vmem:[#allocation10 + $0x50] sm:$0xff]
        %v753 = vld [vmem:[#allocation10 + $0x58] sm:$0xff]
        %v754 = vld [vmem:[#allocation10 + $0x60] sm:$0xff]
        %v755 = vld [vmem:[#allocation10 + $0x68] sm:$0xff]
        %v756 = vld [vmem:[#allocation10 + $0x70] sm:$0xff]
        %v757 = vld [vmem:[#allocation10 + $0x78] sm:$0xff]
        %v758 = vld [vmem:[%s7] sm:$0x1]
        %v760 = vlaneseq
        %v761 = vshrl.u32 %v760, 7
        %v762 = vsub.s32 0, %v761
        %v763 = vrot.slane %v758, %v762
        %765 = vmatprep.subr.mxu0 0.0
        %766 = vmatpush1.msra.mxu0 %v757
        %767 = vmatprep.subr.mxu0 0.0
        %768 = vmatpush1.msra.mxu0 %v756
        %769 = vmatprep.subr.mxu0 0.0
        %770 = vmatpush1.msra.mxu0 %v755
        %771 = vmatprep.subr.mxu0 0.0
        %772 = vmatpush1.msra.mxu0 %v754
        %773 = vmatprep.subr.mxu0 0.0
        %774 = vmatpush1.msra.mxu0 %v753
        %775 = vmatprep.subr.mxu0 0.0
        %776 = vmatpush1.msra.mxu0 %v752
        %777 = vmatprep.subr.mxu0 0.0
        %778 = vmatpush1.msra.mxu0 %v751
        %779 = vmatprep.subr.mxu0 0.0
        %780 = vmatpush1.msra.mxu0 %v750
        %781 = vmatprep.subr.mxu0 0.0
        %782 = vmatpush1.msra.mxu0 %v749
        %783 = vmatprep.subr.mxu0 0.0
        %784 = vmatpush1.msra.mxu0 %v748
        %785 = vmatprep.subr.mxu0 0.0
        %786 = vmatpush1.msra.mxu0 %v747
        %787 = vmatprep.subr.mxu0 0.0
        %788 = vmatpush1.msra.mxu0 %v746
        %789 = vmatprep.subr.mxu0 0.0
        %790 = vmatpush1.msra.mxu0 %v745
        %791 = vmatprep.subr.mxu0 0.0
        %792 = vmatpush1.msra.mxu0 %v744
        %793 = vmatprep.subr.mxu0 0.0
        %794 = vmatpush1.msra.mxu0 %v743
        %795 = vmatprep.subr.mxu0 0.0
        %796 = vmatpush1.msra.mxu0 %v742
        %797 = vmatprep.subr.mxu0 0.0
        %798 = vmatpush2.msra.mxu0 0.0
        %799 = vmatprep.subr.mxu0 0.0
        %800 = vmatpush2.msra.mxu0 0.0
        %801 = vmatprep.subr.mxu0 0.0
        %802 = vmatpush2.msra.mxu0 0.0
        %803 = vmatprep.subr.mxu0 0.0
        %804 = vmatpush2.msra.mxu0 0.0
        %805 = vmatprep.subr.mxu0 0.0
        %806 = vmatpush2.msra.mxu0 0.0
        %807 = vmatprep.subr.mxu0 0.0
        %808 = vmatpush2.msra.mxu0 0.0
        %809 = vmatprep.subr.mxu0 0.0
        %810 = vmatpush2.msra.mxu0 0.0
        %811 = vmatprep.subr.mxu0 0.0
        %812 = vmatpush2.msra.mxu0 0.0
        %813 = vmatprep.subr.mxu0 0.0
        %814 = vmatpush2.msra.mxu0 0.0
        %815 = vmatprep.subr.mxu0 0.0
        %816 = vmatpush2.msra.mxu0 0.0
        %817 = vmatprep.subr.mxu0 0.0
        %818 = vmatpush2.msra.mxu0 0.0
        %819 = vmatprep.subr.mxu0 0.0
        %820 = vmatpush2.msra.mxu0 0.0
        %821 = vmatprep.subr.mxu0 0.0
        %822 = vmatpush2.msra.mxu0 0.0
        %823 = vmatprep.subr.mxu0 0.0
        %824 = vmatpush2.msra.mxu0 0.0
        %825 = vmatprep.subr.mxu0 0.0
        %826 = vmatpush2.msra.mxu0 0.0
        %827 = vmatprep.subr.mxu0 0.0
        %828 = vmatpush2.msra.mxu0 0.0
        %829 = vmatprep.mubr.f32.mxu0 0.0
        %830 = vmatmul.mubr.f32.gmra.mxu0 %v741
        %v831 = vpop.f32.mrf.mxu0
        %v832 = vadd.f32 %v763, %v831
        %v833 = vpop.f32.mrf.mxu0
        %834 = vdwg.mxu0
        %v835 = vmax.f32 %v832, 0.0
        %v836 = vld [vmem:[#allocation11] sm:$0xff]
        %v837 = vld [vmem:[#allocation11 + $0x8] sm:$0xff]
        %v838 = vld [vmem:[#allocation11 + $0x10] sm:$0xff]
        %v839 = vld [vmem:[#allocation11 + $0x18] sm:$0xff]
        %v840 = vld [vmem:[#allocation11 + $0x20] sm:$0xff]
        %v841 = vld [vmem:[#allocation11 + $0x28] sm:$0xff]
        %v842 = vld [vmem:[#allocation11 + $0x30] sm:$0xff]
        %v843 = vld [vmem:[#allocation11 + $0x38] sm:$0xff]
        %v844 = vld [vmem:[#allocation11 + $0x40] sm:$0xff]
        %v845 = vld [vmem:[#allocation11 + $0x48] sm:$0xff]
        %v846 = vld [vmem:[#allocation11 + $0x50] sm:$0xff]
        %v847 = vld [vmem:[#allocation11 + $0x58] sm:$0xff]
        %v848 = vld [vmem:[#allocation11 + $0x60] sm:$0xff]
        %v849 = vld [vmem:[#allocation11 + $0x68] sm:$0xff]
        %v850 = vld [vmem:[#allocation11 + $0x70] sm:$0xff]
        %v851 = vld [vmem:[#allocation11 + $0x78] sm:$0xff]
        %v852 = vld [vmem:[#allocation11 + $0x80] sm:$0xff]
        %v853 = vld [vmem:[#allocation11 + $0x88] sm:$0xff]
        %v854 = vld [vmem:[#allocation11 + $0x90] sm:$0xff]
        %v855 = vld [vmem:[#allocation11 + $0x98] sm:$0xff]
        %v856 = vld [vmem:[#allocation11 + $0xa0] sm:$0xff]
        %v857 = vld [vmem:[#allocation11 + $0xa8] sm:$0xff]
        %v858 = vld [vmem:[#allocation11 + $0xb0] sm:$0xff]
        %v859 = vld [vmem:[#allocation11 + $0xb8] sm:$0xff]
        %v860 = vld [vmem:[#allocation11 + $0xc0] sm:$0xff]
        %v861 = vld [vmem:[#allocation11 + $0xc8] sm:$0xff]
        %v862 = vld [vmem:[#allocation11 + $0xd0] sm:$0xff]
        %v863 = vld [vmem:[#allocation11 + $0xd8] sm:$0xff]
        %v864 = vld [vmem:[#allocation11 + $0xe0] sm:$0xff]
        %v865 = vld [vmem:[#allocation11 + $0xe8] sm:$0xff]
        %v866 = vld [vmem:[#allocation11 + $0xf0] sm:$0xff]
        %v867 = vld [vmem:[#allocation11 + $0xf8] sm:$0xff]
        %v868 = vld [vmem:[%s9] sm:$0x3]
        %v870 = vlaneseq
        %v871 = vshrl.u32 %v870, 7
        %v872 = vsub.s32 0, %v871
        %v873 = vrot.slane %v868, %v872
        %v874 = vlaneseq
        %v875 = vshrl.u32 %v874, 7
        %v876 = vsub.s32 1, %v875
        %v877 = vrot.slane %v868, %v876
        %880 = vmatprep.subr.mxu0 %v867
        %881 = vmatpush1.msra.mxu0 %v866
        %882 = vmatprep.subr.mxu0 %v865
        %883 = vmatpush1.msra.mxu0 %v864
        %884 = vmatprep.subr.mxu0 %v863
        %885 = vmatpush1.msra.mxu0 %v862
        %886 = vmatprep.subr.mxu0 %v861
        %887 = vmatpush1.msra.mxu0 %v860
        %888 = vmatprep.subr.mxu0 %v859
        %889 = vmatpush1.msra.mxu0 %v858
        %890 = vmatprep.subr.mxu0 %v857
        %891 = vmatpush1.msra.mxu0 %v856
        %892 = vmatprep.subr.mxu0 %v855
        %893 = vmatpush1.msra.mxu0 %v854
        %894 = vmatprep.subr.mxu0 %v853
        %895 = vmatpush1.msra.mxu0 %v852
        %896 = vmatprep.subr.mxu0 %v851
        %897 = vmatpush1.msra.mxu0 %v850
        %898 = vmatprep.subr.mxu0 %v849
        %899 = vmatpush1.msra.mxu0 %v848
        %900 = vmatprep.subr.mxu0 %v847
        %901 = vmatpush1.msra.mxu0 %v846
        %902 = vmatprep.subr.mxu0 %v845
        %903 = vmatpush1.msra.mxu0 %v844
        %904 = vmatprep.subr.mxu0 %v843
        %905 = vmatpush1.msra.mxu0 %v842
        %906 = vmatprep.subr.mxu0 %v841
        %907 = vmatpush1.msra.mxu0 %v840
        %908 = vmatprep.subr.mxu0 %v839
        %909 = vmatpush1.msra.mxu0 %v838
        %910 = vmatprep.subr.mxu0 %v837
        %911 = vmatpush1.msra.mxu0 %v836
        %912 = vmatprep.subr.mxu0 0.0
        %913 = vmatpush2.msra.mxu0 0.0
        %914 = vmatprep.subr.mxu0 0.0
        %915 = vmatpush2.msra.mxu0 0.0
        %916 = vmatprep.subr.mxu0 0.0
        %917 = vmatpush2.msra.mxu0 0.0
        %918 = vmatprep.subr.mxu0 0.0
        %919 = vmatpush2.msra.mxu0 0.0
        %920 = vmatprep.subr.mxu0 0.0
        %921 = vmatpush2.msra.mxu0 0.0
        %922 = vmatprep.subr.mxu0 0.0
        %923 = vmatpush2.msra.mxu0 0.0
        %924 = vmatprep.subr.mxu0 0.0
        %925 = vmatpush2.msra.mxu0 0.0
        %926 = vmatprep.subr.mxu0 0.0
        %927 = vmatpush2.msra.mxu0 0.0
        %928 = vmatprep.subr.mxu0 0.0
        %929 = vmatpush2.msra.mxu0 0.0
        %930 = vmatprep.subr.mxu0 0.0
        %931 = vmatpush2.msra.mxu0 0.0
        %932 = vmatprep.subr.mxu0 0.0
        %933 = vmatpush2.msra.mxu0 0.0
        %934 = vmatprep.subr.mxu0 0.0
        %935 = vmatpush2.msra.mxu0 0.0
        %936 = vmatprep.subr.mxu0 0.0
        %937 = vmatpush2.msra.mxu0 0.0
        %938 = vmatprep.subr.mxu0 0.0
        %939 = vmatpush2.msra.mxu0 0.0
        %940 = vmatprep.subr.mxu0 0.0
        %941 = vmatpush2.msra.mxu0 0.0
        %942 = vmatprep.subr.mxu0 0.0
        %943 = vmatpush2.msra.mxu0 0.0
        %944 = vmatprep.mubr.f32.mxu0 0.0
        %945 = vmatmul.mubr.f32.gmra.mxu0 %v835
        %v946 = vpop.f32.mrf.mxu0
        %v947 = vadd.f32 %v873, %v946
        %v948 = vpop.f32.mrf.mxu0
        %v949 = vadd.f32 %v877, %v948
        %950 = vdwg.mxu0
        %v951 = vxor.u32 %v947, 2147483648
        %v952 = vxor.u32 %v949, 2147483648
        %v953 = vmul.f32 %v951, 1.442695
        %v954 = vpow.pop %v953
        %v955 = vmul.f32 %v952, 1.442695
        %v956 = vpow.pop %v955
        %v957 = vadd.f32 %v954, 1.0
        %v958 = vadd.f32 %v956, 1.0
        %v959 = vrcp.pop %v957
        %v960 = vmul.f32 1.0, %v959
        %v961 = vrcp.pop %v958
        %v962 = vmul.f32 1.0, %v961
        %963 = vst [vmem:[%s501] sm:$0xff] %v960
        %964 = vst [vmem:[%s501 + $0x8] sm:$0xff] %v962
        %965 = vst [vmem:[%s508] sm:$0xff] %v733
        %966 = vst [vmem:[%s508 + $0x8] sm:$0xff] %v735
        %s967 = sand.u32 %s265, 1
        %s968 = scalar_lea.sflag [#allocation4], %s967
        %s969 = sand.u32 %s265, 1
        %s970 = smul.addr %s969, 16
        %s971 = scalar_lea.vmem [#allocation13], %s970
        %s972 = sand.u32 %s291, 1
        %s973 = scalar_lea.sflag [#allocation15], %s972
        %s974 = sand.u32 %s291, 1
        %s975 = smul.addr %s974, 16
        %s976 = scalar_lea.vmem [#allocation14], %s975
        // Predicated region
        $region85: #{tpu_custom_call.1} parent=59 // pred_check
          %p977 = pneg %p275
        $region86: #{tpu_custom_call.1} parent=59 // pred_check_branch
          %979 = sbr.rel (%p977) target = $region88
        $region87: #{tpu_custom_call.1} parent=59 // pred_region
          %s981 = ssub.s32 256, 256
          %982 = vsyncadd %s968, %s981
          %s983 = smul.addr %s37, 2
          %s984 = smul.addr %s983, 128
          %s985 = scalar_lea.hbm %s10, %s984
          %s987 = sshll.u32 %s971, 4
          %s988 = int_to_ptr.vmem [resolvable:$true] %s987
          %990 = dma.vmem_to_hbm [thread:$0]  %s988, 256, %s985, %s968
        $region88: #{tpu_custom_call.1} parent=59 // pred_fallthru
          _
        // Predicated region
        $region89: #{tpu_custom_call.1} parent=59 // pred_check
          %p991 = pneg %p301
        $region90: #{tpu_custom_call.1} parent=59 // pred_check_branch
          %993 = sbr.rel (%p991) target = $region92
        $region91: #{tpu_custom_call.1} parent=59 // pred_region
          %s995 = ssub.s32 256, 256
          %996 = vsyncadd %s973, %s995
          %s997 = smul.addr %s37, 2
          %s998 = smul.addr %s997, 128
          %s999 = scalar_lea.hbm %s11, %s998
          %s1001 = sshll.u32 %s976, 4
          %s1002 = int_to_ptr.vmem [resolvable:$true] %s1001
          %1004 = dma.vmem_to_hbm [thread:$0]  %s1002, 256, %s999, %s973
        $region92: #{tpu_custom_call.1} parent=59 // pred_fallthru
          _
      $region60: #{tpu_custom_call.1} parent=5 // pred_fallthru
        _
      %p1005 = scmp.le.s32.totalorder 2, %s32
      // Predicated region
      $region93: #{tpu_custom_call.1} parent=5 // pred_check
        %p1006 = pneg %p1005
      $region94: #{tpu_custom_call.1} parent=5 // pred_check_branch
        %1008 = sbr.rel (%p1006) target = $region96
      $region95: #{tpu_custom_call.1} parent=5 // pred_region
        %s1009 = ssub.s32 %s32, 2
        // Predicated region
        $region97: #{tpu_custom_call.1} parent=95 // pred_check
          %p1010 = pneg %p281
        $region98: #{tpu_custom_call.1} parent=95 // pred_check_branch
          %1012 = sbr.rel (%p1010) target = $region100
        $region99: #{tpu_custom_call.1} parent=95 // pred_region
          %s1013 = sand.u32 %s266, 1
          %s1014 = scalar_lea.sflag [#allocation4], %s1013
          %s1015 = sand.u32 %s266, 1
          %s1016 = smul.addr %s1015, 16
          %s1017 = scalar_lea.vmem [#allocation13], %s1016
          %1018 = dma.done %s1014, 256
        $region100: #{tpu_custom_call.1} parent=95 // pred_fallthru
          _
        // Predicated region
        $region101: #{tpu_custom_call.1} parent=95 // pred_check
          %p1019 = pneg %p307
        $region102: #{tpu_custom_call.1} parent=95 // pred_check_branch
          %1021 = sbr.rel (%p1019) target = $region104
        $region103: #{tpu_custom_call.1} parent=95 // pred_region
          %s1022 = sand.u32 %s292, 1
          %s1023 = scalar_lea.sflag [#allocation15], %s1022
          %s1024 = sand.u32 %s292, 1
          %s1025 = smul.addr %s1024, 16
          %s1026 = scalar_lea.vmem [#allocation14], %s1025
          %1027 = dma.done %s1023, 256
        $region104: #{tpu_custom_call.1} parent=95 // pred_fallthru
          _
      $region96: #{tpu_custom_call.1} parent=5 // pred_fallthru
        _
    $region6: #{tpu_custom_call.1} parent=1 // loop_footer
      %s36 = sadd.s32 1, %s32
    $region7: #{tpu_custom_call.1} parent=1 // loop_footer_branch
      %31 = sbr.rel target = $region3
    $region8: #{tpu_custom_call.1} parent=1 // loop_exit
      _
    %1028 = vsyncpa [#allocation3], 1
    %s1029 = scalar_lea.sflag [#allocation3], 1
    %1030 = vsyncpa %s1029, 1
    %1031 = vsyncpa [#allocation6], 1
    %s1032 = scalar_lea.sflag [#allocation6], 1
    %1033 = vsyncpa %s1032, 1
    %1034 = vsyncpa [#allocation9], 1
    %1035 = vsyncpa [#allocation12], 1
    %1036 = vsyncpa [#allocation4], 1
    %s1037 = scalar_lea.sflag [#allocation4], 1
    %1038 = vsyncpa %s1037, 1
    %1039 = vsyncpa [#allocation15], 1
    %s1040 = scalar_lea.sflag [#allocation15], 1
    %1041 = vsyncpa %s1040, 1

</llo_original>
